<compile_context>
chip_gen: v5e
topology: v5e:2x2
jax: 0.10.0
libtpu: 0.0.40
codegen_flags: <defaults>
</compile_context>

<pallas_src>
import functools

import jax
import jax.numpy as jnp
from jax import lax
from jax.experimental import pallas as pl
from jax.experimental.pallas import tpu as pltpu


def _round_up(x, m):
    return (x + m - 1) // m * m


def senet_kernel(x_ref, w_ref, s1_ref, b1_ref, wa_ref, s2_ref, b2_ref, pw_ref,
                 o_ref, *, Wp, L):
    # x_ref:  (1, Cin, P2)   zero-padded image, spatially flattened row-major (width Wp)
    # w_ref:  (9, Cout, Cin) 3x3 conv weight, tap k = kh*3 + kw
    # s1/b1:  (Cout, 1)      conv-bias + BN1 folded scale/shift (f32)
    # wa_ref: (Cout, Cout)   1x1 attention conv weight (out x in, f32)
    # s2/b2:  (Cout, 1)      BN2 folded scale/shift (f32)
    # pw_ref: (1, L)         pool weights: 1/(H*W) on valid columns, 0 on pad columns
    # o_ref:  (1, Cout, L)   gated features in (channel, flat-padded-spatial) layout
    acc = None
    for kh in range(3):
        for kw in range(3):
            k = kh * 3 + kw
            s = kh * Wp + kw                                   # static lane shift
            xs = x_ref[0, :, s:s + L]                          # (Cin, L), bf16
            d = jnp.dot(w_ref[k], xs, preferred_element_type=jnp.float32)
            acc = d if acc is None else acc + d                # (Cout, L) f32 accum
    feat = jnp.maximum(acc * s1_ref[...] + b1_ref[...], 0.0)   # BN1 + ReLU (f32)
    pooled = jnp.sum(feat * pw_ref[...], axis=1, keepdims=True)        # (Cout, 1)
    atten = jnp.dot(wa_ref[...], pooled, preferred_element_type=jnp.float32)
    atten = jax.nn.sigmoid(atten * s2_ref[...] + b2_ref[...])          # (Cout, 1)
    o_ref[0] = (feat * atten).astype(o_ref.dtype)              # lane-dense store


def senet_forward(x_nchw, w_conv, b_conv, g1, be1, m1, v1, w_att, g2, be2, m2, v2,
                  eps=1e-5, compute_dtype=jnp.bfloat16):
    N, Cin, H, W = x_nchw.shape
    Cout = w_conv.shape[0]
    Hp, Wp = H + 2, W + 2
    L = H * Wp                      # lane extent covering every valid output pixel
    s_max = 2 * Wp + 2              # largest static tap shift
    P = Hp * Wp
    P2 = _round_up(s_max + L, 128)  # padded flat length (zero tail, lane aligned)

    # zero-pad spatially (conv padding=1), flatten, pad tail, cast MXU operand to bf16
    xp = jnp.pad(x_nchw, ((0, 0), (0, 0), (1, 1), (1, 1)))
    x_flat = jnp.pad(xp.reshape(N, Cin, P), ((0, 0), (0, 0), (0, P2 - P)))
    x_flat = x_flat.astype(compute_dtype)

    # conv weight (Cout,Cin,3,3) -> (kh,kw,Cout,Cin) -> (9, Cout, Cin), tap k = kh*3+kw
    w9 = jnp.transpose(w_conv, (2, 3, 0, 1)).reshape(9, Cout, Cin).astype(compute_dtype)

    # fold conv-bias + BN1 and BN2 (inference-mode running stats) into scale/shift
    inv1 = 1.0 / jnp.sqrt(v1 + eps)
    s1 = (g1 * inv1).reshape(Cout, 1).astype(jnp.float32)
    b1 = ((b_conv - m1) * g1 * inv1 + be1).reshape(Cout, 1).astype(jnp.float32)
    inv2 = 1.0 / jnp.sqrt(v2 + eps)
    s2 = (g2 * inv2).reshape(Cout, 1).astype(jnp.float32)
    b2 = (-m2 * g2 * inv2 + be2).reshape(Cout, 1).astype(jnp.float32)
    wa = w_att[:, :, 0, 0].astype(jnp.float32)                 # (Cout_out, Cout_in)

    # masked global-average-pool weights over the (H, Wp) flat window
    col = jnp.arange(L, dtype=jnp.int32) % Wp
    pool_w = jnp.where(col < W, 1.0 / (H * W), 0.0).reshape(1, L).astype(jnp.float32)

    # TODO(synk): for large H*W*Cin add an HW-tile grid axis ("arbitrary") with feat held
    # in VMEM scratch and a pl.when last-tile SE epilogue; at these shapes one image's
    # padded block fits VMEM with large headroom, so whole-image blocks stay simple.
    out_flat = pl.pallas_call(
        functools.partial(senet_kernel, Wp=Wp, L=L),
        out_shape=jax.ShapeDtypeStruct((N, Cout, L), jnp.float32),
        grid_spec=pltpu.PrefetchScalarGridSpec(
            num_scalar_prefetch=0,
            grid=(N,),
            in_specs=[
                pl.BlockSpec((1, Cin, P2), lambda n: (n, 0, 0)),
                pl.BlockSpec((9, Cout, Cin), lambda n: (0, 0, 0)),
                pl.BlockSpec((Cout, 1), lambda n: (0, 0)),
                pl.BlockSpec((Cout, 1), lambda n: (0, 0)),
                pl.BlockSpec((Cout, Cout), lambda n: (0, 0)),
                pl.BlockSpec((Cout, 1), lambda n: (0, 0)),
                pl.BlockSpec((Cout, 1), lambda n: (0, 0)),
                pl.BlockSpec((1, L), lambda n: (0, 0)),
            ],
            out_specs=pl.BlockSpec((1, Cout, L), lambda n: (n, 0, 0)),
        ),
        compiler_params=pltpu.CompilerParams(
            dimension_semantics=("parallel",),
            vmem_limit_bytes=32 * 1024 * 1024,
        ),
    )(x_flat, w9, s1, b1, wa, s2, b2, pool_w)

    # (N, Cout, H*Wp) -> (N, Cout, H, Wp) -> drop the Wp-W pad columns -> NCHW output
    return out_flat.reshape(N, Cout, H, Wp)[:, :, :, :W]


def ref_forward(x, w, b, g1, be1, m1, v1, wa, g2, be2, m2, v2, eps=1e-5):
    # Pure-JAX reference mirroring the PyTorch forward (inference-mode BN).
    feat = lax.conv_general_dilated(x, w, (1, 1), ((1, 1), (1, 1)),
                                    dimension_numbers=("NCHW", "OIHW", "NCHW"))
    feat = feat + b[None, :, None, None]
    feat = ((feat - m1[None, :, None, None]) / jnp.sqrt(v1 + eps)[None, :, None, None]
            * g1[None, :, None, None] + be1[None, :, None, None])
    feat = jnp.maximum(feat, 0.0)
    att = jnp.mean(feat, axis=(2, 3))                          # global avg pool
    att = att @ wa[:, :, 0, 0].T                               # 1x1 conv, no bias
    att = (att - m2) / jnp.sqrt(v2 + eps) * g2 + be2
    att = jax.nn.sigmoid(att)
    return feat * att[:, :, None, None]


if __name__ == "__main__":
    N, Cin, Cout, H, W = 2, 4, 8, 16, 16
    eps = 1e-5
    key = jax.random.PRNGKey(0)
    keys = jax.random.split(key, 12)

    x = jax.random.normal(keys[0], (N, Cin, H, W), jnp.float32)

    # deterministic synthetic parameters (shapes follow the nn.Module __init__)
    w_conv = jax.random.normal(keys[1], (Cout, Cin, 3, 3), jnp.float32) * 0.2
    b_conv = jax.random.normal(keys[2], (Cout,), jnp.float32) * 0.1
    g1 = 1.0 + 0.1 * jax.random.normal(keys[3], (Cout,), jnp.float32)
    be1 = 0.1 * jax.random.normal(keys[4], (Cout,), jnp.float32)
    m1 = 0.1 * jax.random.normal(keys[5], (Cout,), jnp.float32)
    v1 = 1.0 + 0.1 * jnp.abs(jax.random.normal(keys[6], (Cout,), jnp.float32))
    w_att = jax.random.normal(keys[7], (Cout, Cout, 1, 1), jnp.float32) * 0.3
    g2 = 1.0 + 0.1 * jax.random.normal(keys[8], (Cout,), jnp.float32)
    be2 = 0.1 * jax.random.normal(keys[9], (Cout,), jnp.float32)
    m2 = 0.1 * jax.random.normal(keys[10], (Cout,), jnp.float32)
    v2 = 1.0 + 0.1 * jnp.abs(jax.random.normal(keys[11], (Cout,), jnp.float32))

    out = jax.jit(senet_forward)(x, w_conv, b_conv, g1, be1, m1, v1,
                                 w_att, g2, be2, m2, v2)
    out = jax.block_until_ready(out)

    ref = ref_forward(x, w_conv, b_conv, g1, be1, m1, v1, w_att, g2, be2, m2, v2, eps)
    assert out.shape == (N, Cout, H, W)
    # bf16 MXU operands with f32 accumulation -> compare with bf16-level tolerance
    assert jnp.allclose(out, ref, rtol=2e-2, atol=2e-2), \
        float(jnp.max(jnp.abs(out - ref)))

    print("KERNEL_OK")
</pallas_src>

<mosaic_0001>
module attributes {stable_mosaic.version = 11 : i64} {
  func.func @senet_kernel(%arg0: i32, %arg1: memref<1x4x384xbf16, #tpu.memory_space<vmem>>, %arg2: memref<9x8x4xbf16, #tpu.memory_space<vmem>>, %arg3: memref<8x1xf32, #tpu.memory_space<vmem>>, %arg4: memref<8x1xf32, #tpu.memory_space<vmem>>, %arg5: memref<8x8xf32, #tpu.memory_space<vmem>>, %arg6: memref<8x1xf32, #tpu.memory_space<vmem>>, %arg7: memref<8x1xf32, #tpu.memory_space<vmem>>, %arg8: memref<1x288xf32, #tpu.memory_space<vmem>>, %arg9: memref<1x8x288xf32, #tpu.memory_space<vmem>>) attributes {dimension_semantics = [#tpu.dimension_semantics<parallel>], iteration_bounds = array<i64: 2>, scalar_prefetch = 0 : i64, scratch_operands = 0 : i64, tpu.core_type = #tpu.core_type<tc>, window_params = [{transform_indices = @transform_0, window_bounds = array<i64: 1, 4, 384>}, {pipeline_mode = #tpu.pipeline_mode<synchronous>, transform_indices = @transform_1, window_bounds = array<i64: 9, 8, 4>}, {pipeline_mode = #tpu.pipeline_mode<synchronous>, transform_indices = @transform_2, window_bounds = array<i64: 8, 1>}, {pipeline_mode = #tpu.pipeline_mode<synchronous>, transform_indices = @transform_3, window_bounds = array<i64: 8, 1>}, {pipeline_mode = #tpu.pipeline_mode<synchronous>, transform_indices = @transform_4, window_bounds = array<i64: 8, 8>}, {pipeline_mode = #tpu.pipeline_mode<synchronous>, transform_indices = @transform_5, window_bounds = array<i64: 8, 1>}, {pipeline_mode = #tpu.pipeline_mode<synchronous>, transform_indices = @transform_6, window_bounds = array<i64: 8, 1>}, {pipeline_mode = #tpu.pipeline_mode<synchronous>, transform_indices = @transform_7, window_bounds = array<i64: 1, 288>}, {transform_indices = @transform_8, window_bounds = array<i64: 1, 8, 288>}]} {
    %c0 = arith.constant 0 : index
    %c0_0 = arith.constant 0 : index
    %c0_1 = arith.constant 0 : index
    %0 = vector.load %arg1[%c0, %c0_0, %c0_1] : memref<1x4x384xbf16, #tpu.memory_space<vmem>>, vector<1x4x288xbf16>
    %1 = vector.shape_cast %0 : vector<1x4x288xbf16> to vector<4x288xbf16>
    %c0_2 = arith.constant 0 : index
    %c0_3 = arith.constant 0 : index
    %c0_4 = arith.constant 0 : index
    %2 = vector.load %arg2[%c0_2, %c0_3, %c0_4] : memref<9x8x4xbf16, #tpu.memory_space<vmem>>, vector<1x8x4xbf16>
    %3 = vector.shape_cast %2 : vector<1x8x4xbf16> to vector<8x4xbf16>
    %cst = arith.constant dense<0.000000e+00> : vector<8x288xf32>
    %4 = tpu.matmul %3, %1, %cst {dimension_numbers = #tpu.dot_dimension_numbers<[1], [0], [0], [1], [0, 0, 1, 1], [], []>} : vector<8x4xbf16>, vector<4x288xbf16>, vector<8x288xf32> -> vector<8x288xf32>
    %c0_5 = arith.constant 0 : index
    %c0_6 = arith.constant 0 : index
    %c1 = arith.constant 1 : index
    %5 = vector.load %arg1[%c0_5, %c0_6, %c1] : memref<1x4x384xbf16, #tpu.memory_space<vmem>>, vector<1x4x288xbf16>
    %6 = vector.shape_cast %5 : vector<1x4x288xbf16> to vector<4x288xbf16>
    %c1_7 = arith.constant 1 : index
    %c0_8 = arith.constant 0 : index
    %c0_9 = arith.constant 0 : index
    %7 = vector.load %arg2[%c1_7, %c0_8, %c0_9] : memref<9x8x4xbf16, #tpu.memory_space<vmem>>, vector<1x8x4xbf16>
    %8 = vector.shape_cast %7 : vector<1x8x4xbf16> to vector<8x4xbf16>
    %cst_10 = arith.constant dense<0.000000e+00> : vector<8x288xf32>
    %9 = tpu.matmul %8, %6, %cst_10 {dimension_numbers = #tpu.dot_dimension_numbers<[1], [0], [0], [1], [0, 0, 1, 1], [], []>} : vector<8x4xbf16>, vector<4x288xbf16>, vector<8x288xf32> -> vector<8x288xf32>
    %10 = arith.addf %4, %9 : vector<8x288xf32>
    %c0_11 = arith.constant 0 : index
    %c0_12 = arith.constant 0 : index
    %c2 = arith.constant 2 : index
    %11 = vector.load %arg1[%c0_11, %c0_12, %c2] : memref<1x4x384xbf16, #tpu.memory_space<vmem>>, vector<1x4x288xbf16>
    %12 = vector.shape_cast %11 : vector<1x4x288xbf16> to vector<4x288xbf16>
    %c2_13 = arith.constant 2 : index
    %c0_14 = arith.constant 0 : index
    %c0_15 = arith.constant 0 : index
    %13 = vector.load %arg2[%c2_13, %c0_14, %c0_15] : memref<9x8x4xbf16, #tpu.memory_space<vmem>>, vector<1x8x4xbf16>
    %14 = vector.shape_cast %13 : vector<1x8x4xbf16> to vector<8x4xbf16>
    %cst_16 = arith.constant dense<0.000000e+00> : vector<8x288xf32>
    %15 = tpu.matmul %14, %12, %cst_16 {dimension_numbers = #tpu.dot_dimension_numbers<[1], [0], [0], [1], [0, 0, 1, 1], [], []>} : vector<8x4xbf16>, vector<4x288xbf16>, vector<8x288xf32> -> vector<8x288xf32>
    %16 = arith.addf %10, %15 : vector<8x288xf32>
    %c0_17 = arith.constant 0 : index
    %c0_18 = arith.constant 0 : index
    %c18 = arith.constant 18 : index
    %17 = vector.load %arg1[%c0_17, %c0_18, %c18] : memref<1x4x384xbf16, #tpu.memory_space<vmem>>, vector<1x4x288xbf16>
    %18 = vector.shape_cast %17 : vector<1x4x288xbf16> to vector<4x288xbf16>
    %c3 = arith.constant 3 : index
    %c0_19 = arith.constant 0 : index
    %c0_20 = arith.constant 0 : index
    %19 = vector.load %arg2[%c3, %c0_19, %c0_20] : memref<9x8x4xbf16, #tpu.memory_space<vmem>>, vector<1x8x4xbf16>
    %20 = vector.shape_cast %19 : vector<1x8x4xbf16> to vector<8x4xbf16>
    %cst_21 = arith.constant dense<0.000000e+00> : vector<8x288xf32>
    %21 = tpu.matmul %20, %18, %cst_21 {dimension_numbers = #tpu.dot_dimension_numbers<[1], [0], [0], [1], [0, 0, 1, 1], [], []>} : vector<8x4xbf16>, vector<4x288xbf16>, vector<8x288xf32> -> vector<8x288xf32>
    %22 = arith.addf %16, %21 : vector<8x288xf32>
    %c0_22 = arith.constant 0 : index
    %c0_23 = arith.constant 0 : index
    %c19 = arith.constant 19 : index
    %23 = vector.load %arg1[%c0_22, %c0_23, %c19] : memref<1x4x384xbf16, #tpu.memory_space<vmem>>, vector<1x4x288xbf16>
    %24 = vector.shape_cast %23 : vector<1x4x288xbf16> to vector<4x288xbf16>
    %c4 = arith.constant 4 : index
    %c0_24 = arith.constant 0 : index
    %c0_25 = arith.constant 0 : index
    %25 = vector.load %arg2[%c4, %c0_24, %c0_25] : memref<9x8x4xbf16, #tpu.memory_space<vmem>>, vector<1x8x4xbf16>
    %26 = vector.shape_cast %25 : vector<1x8x4xbf16> to vector<8x4xbf16>
    %cst_26 = arith.constant dense<0.000000e+00> : vector<8x288xf32>
    %27 = tpu.matmul %26, %24, %cst_26 {dimension_numbers = #tpu.dot_dimension_numbers<[1], [0], [0], [1], [0, 0, 1, 1], [], []>} : vector<8x4xbf16>, vector<4x288xbf16>, vector<8x288xf32> -> vector<8x288xf32>
    %28 = arith.addf %22, %27 : vector<8x288xf32>
    %c0_27 = arith.constant 0 : index
    %c0_28 = arith.constant 0 : index
    %c20 = arith.constant 20 : index
    %29 = vector.load %arg1[%c0_27, %c0_28, %c20] : memref<1x4x384xbf16, #tpu.memory_space<vmem>>, vector<1x4x288xbf16>
    %30 = vector.shape_cast %29 : vector<1x4x288xbf16> to vector<4x288xbf16>
    %c5 = arith.constant 5 : index
    %c0_29 = arith.constant 0 : index
    %c0_30 = arith.constant 0 : index
    %31 = vector.load %arg2[%c5, %c0_29, %c0_30] : memref<9x8x4xbf16, #tpu.memory_space<vmem>>, vector<1x8x4xbf16>
    %32 = vector.shape_cast %31 : vector<1x8x4xbf16> to vector<8x4xbf16>
    %cst_31 = arith.constant dense<0.000000e+00> : vector<8x288xf32>
    %33 = tpu.matmul %32, %30, %cst_31 {dimension_numbers = #tpu.dot_dimension_numbers<[1], [0], [0], [1], [0, 0, 1, 1], [], []>} : vector<8x4xbf16>, vector<4x288xbf16>, vector<8x288xf32> -> vector<8x288xf32>
    %34 = arith.addf %28, %33 : vector<8x288xf32>
    %c0_32 = arith.constant 0 : index
    %c0_33 = arith.constant 0 : index
    %c36 = arith.constant 36 : index
    %35 = vector.load %arg1[%c0_32, %c0_33, %c36] : memref<1x4x384xbf16, #tpu.memory_space<vmem>>, vector<1x4x288xbf16>
    %36 = vector.shape_cast %35 : vector<1x4x288xbf16> to vector<4x288xbf16>
    %c6 = arith.constant 6 : index
    %c0_34 = arith.constant 0 : index
    %c0_35 = arith.constant 0 : index
    %37 = vector.load %arg2[%c6, %c0_34, %c0_35] : memref<9x8x4xbf16, #tpu.memory_space<vmem>>, vector<1x8x4xbf16>
    %38 = vector.shape_cast %37 : vector<1x8x4xbf16> to vector<8x4xbf16>
    %cst_36 = arith.constant dense<0.000000e+00> : vector<8x288xf32>
    %39 = tpu.matmul %38, %36, %cst_36 {dimension_numbers = #tpu.dot_dimension_numbers<[1], [0], [0], [1], [0, 0, 1, 1], [], []>} : vector<8x4xbf16>, vector<4x288xbf16>, vector<8x288xf32> -> vector<8x288xf32>
    %40 = arith.addf %34, %39 : vector<8x288xf32>
    %c0_37 = arith.constant 0 : index
    %c0_38 = arith.constant 0 : index
    %c37 = arith.constant 37 : index
    %41 = vector.load %arg1[%c0_37, %c0_38, %c37] : memref<1x4x384xbf16, #tpu.memory_space<vmem>>, vector<1x4x288xbf16>
    %42 = vector.shape_cast %41 : vector<1x4x288xbf16> to vector<4x288xbf16>
    %c7 = arith.constant 7 : index
    %c0_39 = arith.constant 0 : index
    %c0_40 = arith.constant 0 : index
    %43 = vector.load %arg2[%c7, %c0_39, %c0_40] : memref<9x8x4xbf16, #tpu.memory_space<vmem>>, vector<1x8x4xbf16>
    %44 = vector.shape_cast %43 : vector<1x8x4xbf16> to vector<8x4xbf16>
    %cst_41 = arith.constant dense<0.000000e+00> : vector<8x288xf32>
    %45 = tpu.matmul %44, %42, %cst_41 {dimension_numbers = #tpu.dot_dimension_numbers<[1], [0], [0], [1], [0, 0, 1, 1], [], []>} : vector<8x4xbf16>, vector<4x288xbf16>, vector<8x288xf32> -> vector<8x288xf32>
    %46 = arith.addf %40, %45 : vector<8x288xf32>
    %c0_42 = arith.constant 0 : index
    %c0_43 = arith.constant 0 : index
    %c38 = arith.constant 38 : index
    %47 = vector.load %arg1[%c0_42, %c0_43, %c38] : memref<1x4x384xbf16, #tpu.memory_space<vmem>>, vector<1x4x288xbf16>
    %48 = vector.shape_cast %47 : vector<1x4x288xbf16> to vector<4x288xbf16>
    %c8 = arith.constant 8 : index
    %c0_44 = arith.constant 0 : index
    %c0_45 = arith.constant 0 : index
    %49 = vector.load %arg2[%c8, %c0_44, %c0_45] : memref<9x8x4xbf16, #tpu.memory_space<vmem>>, vector<1x8x4xbf16>
    %50 = vector.shape_cast %49 : vector<1x8x4xbf16> to vector<8x4xbf16>
    %cst_46 = arith.constant dense<0.000000e+00> : vector<8x288xf32>
    %51 = tpu.matmul %50, %48, %cst_46 {dimension_numbers = #tpu.dot_dimension_numbers<[1], [0], [0], [1], [0, 0, 1, 1], [], []>} : vector<8x4xbf16>, vector<4x288xbf16>, vector<8x288xf32> -> vector<8x288xf32>
    %52 = arith.addf %46, %51 : vector<8x288xf32>
    %c0_47 = arith.constant 0 : index
    %c0_48 = arith.constant 0 : index
    %53 = vector.load %arg3[%c0_47, %c0_48] : memref<8x1xf32, #tpu.memory_space<vmem>>, vector<8x1xf32>
    %54 = vector.broadcast %53 : vector<8x1xf32> to vector<8x288xf32>
    %55 = arith.mulf %52, %54 : vector<8x288xf32>
    %c0_49 = arith.constant 0 : index
    %c0_50 = arith.constant 0 : index
    %56 = vector.load %arg4[%c0_49, %c0_50] : memref<8x1xf32, #tpu.memory_space<vmem>>, vector<8x1xf32>
    %57 = vector.broadcast %56 : vector<8x1xf32> to vector<8x288xf32>
    %58 = arith.addf %55, %57 : vector<8x288xf32>
    %cst_51 = arith.constant 0.000000e+00 : f32
    %59 = vector.broadcast %cst_51 : f32 to vector<8x288xf32>
    %60 = arith.maximumf %58, %59 : vector<8x288xf32>
    %c0_52 = arith.constant 0 : index
    %c0_53 = arith.constant 0 : index
    %61 = vector.load %arg8[%c0_52, %c0_53] : memref<1x288xf32, #tpu.memory_space<vmem>>, vector<1x288xf32>
    %62 = vector.broadcast %61 : vector<1x288xf32> to vector<8x288xf32>
    %63 = arith.mulf %60, %62 : vector<8x288xf32>
    %cst_54 = arith.constant dense<0.000000e+00> : vector<8xf32>
    %64 = vector.multi_reduction <add>, %63, %cst_54 [1] : vector<8x288xf32> to vector<8xf32>
    %65 = vector.shape_cast %64 : vector<8xf32> to vector<8x1xf32>
    %c0_55 = arith.constant 0 : index
    %c0_56 = arith.constant 0 : index
    %66 = vector.load %arg5[%c0_55, %c0_56] : memref<8x8xf32, #tpu.memory_space<vmem>>, vector<8x8xf32>
    %cst_57 = arith.constant dense<0.000000e+00> : vector<8x1xf32>
    %67 = tpu.matmul %66, %65, %cst_57 {dimension_numbers = #tpu.dot_dimension_numbers<[1], [0], [0], [1], [0, 0, 1, 1], [], []>} : vector<8x8xf32>, vector<8x1xf32>, vector<8x1xf32> -> vector<8x1xf32>
    %c0_58 = arith.constant 0 : index
    %c0_59 = arith.constant 0 : index
    %68 = vector.load %arg6[%c0_58, %c0_59] : memref<8x1xf32, #tpu.memory_space<vmem>>, vector<8x1xf32>
    %69 = arith.mulf %67, %68 : vector<8x1xf32>
    %c0_60 = arith.constant 0 : index
    %c0_61 = arith.constant 0 : index
    %70 = vector.load %arg7[%c0_60, %c0_61] : memref<8x1xf32, #tpu.memory_space<vmem>>, vector<8x1xf32>
    %71 = arith.addf %69, %70 : vector<8x1xf32>
    %72 = arith.negf %71 : vector<8x1xf32>
    %73 = math.exp %72 : vector<8x1xf32>
    %cst_62 = arith.constant 1.000000e+00 : f32
    %74 = vector.broadcast %cst_62 : f32 to vector<8x1xf32>
    %75 = arith.addf %74, %73 : vector<8x1xf32>
    %76 = arith.divf %74, %75 : vector<8x1xf32>
    %77 = vector.broadcast %76 : vector<8x1xf32> to vector<8x288xf32>
    %78 = arith.mulf %60, %77 : vector<8x288xf32>
    %c0_63 = arith.constant 0 : index
    %c0_64 = arith.constant 0 : index
    %c0_65 = arith.constant 0 : index
    %79 = vector.load %arg9[%c0_63, %c0_64, %c0_65] : memref<1x8x288xf32, #tpu.memory_space<vmem>>, vector<1x8x288xf32>
    %80 = vector.shape_cast %79 : vector<1x8x288xf32> to vector<8x288xf32>
    %81 = vector.shape_cast %78 : vector<8x288xf32> to vector<1x8x288xf32>
    tpu.vector_store %arg9[%c0_63, %c0_64, %c0_65], %81 {strides = array<i32>} : memref<1x8x288xf32, #tpu.memory_space<vmem>>, vector<1x8x288xf32>,
    return
  }
  func.func @transform_0(%arg0: i32) -> (i32, i32, i32) {
    %c0_i32 = arith.constant 0 : i32
    %c0_i32_0 = arith.constant 0 : i32
    %c0_i32_1 = arith.constant 0 : i32
    return %arg0, %c0_i32, %c0_i32_0 : i32, i32, i32
  }
  func.func @transform_1(%arg0: i32) -> (i32, i32, i32) {
    %c0_i32 = arith.constant 0 : i32
    %c0_i32_0 = arith.constant 0 : i32
    %c0_i32_1 = arith.constant 0 : i32
    %c0_i32_2 = arith.constant 0 : i32
    return %c0_i32, %c0_i32_0, %c0_i32_1 : i32, i32, i32
  }
  func.func @transform_2(%arg0: i32) -> (i32, i32) {
    %c0_i32 = arith.constant 0 : i32
    %c0_i32_0 = arith.constant 0 : i32
    %c0_i32_1 = arith.constant 0 : i32
    return %c0_i32, %c0_i32_0 : i32, i32
  }
  func.func @transform_3(%arg0: i32) -> (i32, i32) {
    %c0_i32 = arith.constant 0 : i32
    %c0_i32_0 = arith.constant 0 : i32
    %c0_i32_1 = arith.constant 0 : i32
    return %c0_i32, %c0_i32_0 : i32, i32
  }
  func.func @transform_4(%arg0: i32) -> (i32, i32) {
    %c0_i32 = arith.constant 0 : i32
    %c0_i32_0 = arith.constant 0 : i32
    %c0_i32_1 = arith.constant 0 : i32
    return %c0_i32, %c0_i32_0 : i32, i32
  }
  func.func @transform_5(%arg0: i32) -> (i32, i32) {
    %c0_i32 = arith.constant 0 : i32
    %c0_i32_0 = arith.constant 0 : i32
    %c0_i32_1 = arith.constant 0 : i32
    return %c0_i32, %c0_i32_0 : i32, i32
  }
  func.func @transform_6(%arg0: i32) -> (i32, i32) {
    %c0_i32 = arith.constant 0 : i32
    %c0_i32_0 = arith.constant 0 : i32
    %c0_i32_1 = arith.constant 0 : i32
    return %c0_i32, %c0_i32_0 : i32, i32
  }
  func.func @transform_7(%arg0: i32) -> (i32, i32) {
    %c0_i32 = arith.constant 0 : i32
    %c0_i32_0 = arith.constant 0 : i32
    %c0_i32_1 = arith.constant 0 : i32
    return %c0_i32, %c0_i32_0 : i32, i32
  }
  func.func @transform_8(%arg0: i32) -> (i32, i32, i32) {
    %c0_i32 = arith.constant 0 : i32
    %c0_i32_0 = arith.constant 0 : i32
    %c0_i32_1 = arith.constant 0 : i32
    return %arg0, %c0_i32, %c0_i32_0 : i32, i32, i32
  }
}

</mosaic_0001>

<llo_original>
// kernel: senet_forward.1
$region0: #{senet_forward.1}
  #allocation0 [shape = 'u32[]', space=smem, size = 0x4, offset = 0x4, fixed_abs, tag = 'smem constant byte address 0x4 - core index']
  #allocation1 [shape = 'u32[72,128]{1,0:T(1,128)}', space=vmem, size = 0x9000, scoped, tag = 'internal scratch']
  %s0 = inlined_call_operand.vmem [shape: bf16[2,4,384], index: 0, kind: input, shape index: {}]
  %s1 = inlined_call_operand.vmem [shape: bf16[9,8,4], index: 1, kind: input, shape index: {}]
  %s2 = inlined_call_operand.vmem [shape: f32[8,1], index: 2, kind: input, shape index: {}]
  %s3 = inlined_call_operand.vmem [shape: f32[8,1], index: 3, kind: input, shape index: {}]
  %s4 = inlined_call_operand.vmem [shape: f32[8,8], index: 4, kind: input, shape index: {}]
  %s5 = inlined_call_operand.vmem [shape: f32[8,1], index: 5, kind: input, shape index: {}]
  %s6 = inlined_call_operand.vmem [shape: f32[8,1], index: 6, kind: input, shape index: {}]
  %s7 = inlined_call_operand.vmem [shape: f32[1,288], index: 7, kind: input, shape index: {}]
  %s8 = inlined_call_operand.vmem [shape: f32[2,8,288], index: 8, kind: output, shape index: {}]
  %s9 = sld [smem:[#allocation0]]
  $region65: #{senet_forward.1} parent=0
    _
  %s11 = ssub.s32 1, %s9
  %s12 = scalar_select 0, %s11, %s9
  loop: start=0, step=1, limit=4
  $region2: #{senet_forward.1} parent=0 // loop_pre_header
    _
  $region3: #{senet_forward.1} parent=0 // loop_header
    %s14 = sphi 0, %s18
    %p15 = scmp.ge.s32.totalorder %s14, 4
    %s24 = sphi 0, %s26
    %s27 = sphi 0, %s24
    %s28 = sphi 0, %s27
    %s44 = sphi 0, %s28
    %s48 = sphi 0, %s48
    %s50 = sphi 0, %s48
    %s51 = sphi 0, %s50
    %s65 = sphi 0, %s51
    %s69 = sphi 0, %s69
    %s71 = sphi 0, %s69
    %s72 = sphi 0, %s71
    %s86 = sphi 0, %s72
    %s90 = sphi 0, %s90
    %s92 = sphi 0, %s90
    %s93 = sphi 0, %s92
    %s107 = sphi 0, %s93
    %s111 = sphi 0, %s111
    %s113 = sphi 0, %s111
    %s114 = sphi 0, %s113
    %s128 = sphi 0, %s114
    %s132 = sphi 0, %s132
    %s134 = sphi 0, %s132
    %s135 = sphi 0, %s134
    %s149 = sphi 0, %s135
    %s153 = sphi 0, %s153
    %s155 = sphi 0, %s153
    %s156 = sphi 0, %s155
    %s170 = sphi 0, %s156
    %s174 = sphi 0, %s174
    %s176 = sphi 0, %s174
    %s177 = sphi 0, %s176
    %s191 = sphi 0, %s177
    %s197 = sphi 0, %s199
    %s200 = sphi 0, %s197
    %s201 = sphi 0, %s200
    %s217 = sphi 0, %s201
  $region4: #{senet_forward.1} parent=0 // loop_header_branch
    %17 = sbr.rel (%p15) target = $region8
  $region5: #{senet_forward.1} parent=0 // loop_body
    %s19 = ssub.s32 %s14, 1
    %s20 = ssub.s32 %s14, 2
    %s21 = sadd.s32 %s14, 1
    %s22 = ssub.s32 %s14, %s21
    %p23 = scmp.eq.s32.totalorder %s22, 0
    %s25 = sadd.s32 %s24, 1
    %s26 = scalar_select %p23, %s24, %s25
    %p29 = pneg %p23
    %p30 = scmp.eq.s32.totalorder %s14, 1
    %p31 = por %p29, %p30
    %p32 = scmp.ne.s32.totalorder %s24, %s27
    %p33 = scmp.eq.s32.totalorder %s14, 0
    %p34 = por %p32, %p33
    %p35 = scmp.ne.s32.totalorder %s24, %s27
    %p36 = scmp.eq.s32.totalorder %s19, 1
    %p37 = por %p35, %p36
    %p38 = scmp.ne.s32.totalorder %s27, %s28
    %p39 = scmp.eq.s32.totalorder %s19, 0
    %p40 = por %p38, %p39
    %p41 = scmp.ne.s32.totalorder %s27, %s28
    %p42 = scmp.eq.s32.totalorder %s20, 1
    %p43 = por %p41, %p42
    %p45 = scmp.ne.s32.totalorder %s28, %s44
    %p46 = scmp.eq.s32.totalorder %s20, 0
    %p47 = por %p45, %p46
    %s49 = sadd.s32 %s48, 1
    %p52 = scmp.eq.s32.totalorder %s14, 1
    %p53 = scmp.ne.s32.totalorder %s48, %s50
    %p54 = scmp.eq.s32.totalorder %s14, 0
    %p55 = por %p53, %p54
    %p56 = scmp.ne.s32.totalorder %s48, %s50
    %p57 = scmp.eq.s32.totalorder %s19, 1
    %p58 = por %p56, %p57
    %p59 = scmp.ne.s32.totalorder %s50, %s51
    %p60 = scmp.eq.s32.totalorder %s19, 0
    %p61 = por %p59, %p60
    %p62 = scmp.ne.s32.totalorder %s50, %s51
    %p63 = scmp.eq.s32.totalorder %s20, 1
    %p64 = por %p62, %p63
    %p66 = scmp.ne.s32.totalorder %s51, %s65
    %p67 = scmp.eq.s32.totalorder %s20, 0
    %p68 = por %p66, %p67
    %s70 = sadd.s32 %s69, 1
    %p73 = scmp.eq.s32.totalorder %s14, 1
    %p74 = scmp.ne.s32.totalorder %s69, %s71
    %p75 = scmp.eq.s32.totalorder %s14, 0
    %p76 = por %p74, %p75
    %p77 = scmp.ne.s32.totalorder %s69, %s71
    %p78 = scmp.eq.s32.totalorder %s19, 1
    %p79 = por %p77, %p78
    %p80 = scmp.ne.s32.totalorder %s71, %s72
    %p81 = scmp.eq.s32.totalorder %s19, 0
    %p82 = por %p80, %p81
    %p83 = scmp.ne.s32.totalorder %s71, %s72
    %p84 = scmp.eq.s32.totalorder %s20, 1
    %p85 = por %p83, %p84
    %p87 = scmp.ne.s32.totalorder %s72, %s86
    %p88 = scmp.eq.s32.totalorder %s20, 0
    %p89 = por %p87, %p88
    %s91 = sadd.s32 %s90, 1
    %p94 = scmp.eq.s32.totalorder %s14, 1
    %p95 = scmp.ne.s32.totalorder %s90, %s92
    %p96 = scmp.eq.s32.totalorder %s14, 0
    %p97 = por %p95, %p96
    %p98 = scmp.ne.s32.totalorder %s90, %s92
    %p99 = scmp.eq.s32.totalorder %s19, 1
    %p100 = por %p98, %p99
    %p101 = scmp.ne.s32.totalorder %s92, %s93
    %p102 = scmp.eq.s32.totalorder %s19, 0
    %p103 = por %p101, %p102
    %p104 = scmp.ne.s32.totalorder %s92, %s93
    %p105 = scmp.eq.s32.totalorder %s20, 1
    %p106 = por %p104, %p105
    %p108 = scmp.ne.s32.totalorder %s93, %s107
    %p109 = scmp.eq.s32.totalorder %s20, 0
    %p110 = por %p108, %p109
    %s112 = sadd.s32 %s111, 1
    %p115 = scmp.eq.s32.totalorder %s14, 1
    %p116 = scmp.ne.s32.totalorder %s111, %s113
    %p117 = scmp.eq.s32.totalorder %s14, 0
    %p118 = por %p116, %p117
    %p119 = scmp.ne.s32.totalorder %s111, %s113
    %p120 = scmp.eq.s32.totalorder %s19, 1
    %p121 = por %p119, %p120
    %p122 = scmp.ne.s32.totalorder %s113, %s114
    %p123 = scmp.eq.s32.totalorder %s19, 0
    %p124 = por %p122, %p123
    %p125 = scmp.ne.s32.totalorder %s113, %s114
    %p126 = scmp.eq.s32.totalorder %s20, 1
    %p127 = por %p125, %p126
    %p129 = scmp.ne.s32.totalorder %s114, %s128
    %p130 = scmp.eq.s32.totalorder %s20, 0
    %p131 = por %p129, %p130
    %s133 = sadd.s32 %s132, 1
    %p136 = scmp.eq.s32.totalorder %s14, 1
    %p137 = scmp.ne.s32.totalorder %s132, %s134
    %p138 = scmp.eq.s32.totalorder %s14, 0
    %p139 = por %p137, %p138
    %p140 = scmp.ne.s32.totalorder %s132, %s134
    %p141 = scmp.eq.s32.totalorder %s19, 1
    %p142 = por %p140, %p141
    %p143 = scmp.ne.s32.totalorder %s134, %s135
    %p144 = scmp.eq.s32.totalorder %s19, 0
    %p145 = por %p143, %p144
    %p146 = scmp.ne.s32.totalorder %s134, %s135
    %p147 = scmp.eq.s32.totalorder %s20, 1
    %p148 = por %p146, %p147
    %p150 = scmp.ne.s32.totalorder %s135, %s149
    %p151 = scmp.eq.s32.totalorder %s20, 0
    %p152 = por %p150, %p151
    %s154 = sadd.s32 %s153, 1
    %p157 = scmp.eq.s32.totalorder %s14, 1
    %p158 = scmp.ne.s32.totalorder %s153, %s155
    %p159 = scmp.eq.s32.totalorder %s14, 0
    %p160 = por %p158, %p159
    %p161 = scmp.ne.s32.totalorder %s153, %s155
    %p162 = scmp.eq.s32.totalorder %s19, 1
    %p163 = por %p161, %p162
    %p164 = scmp.ne.s32.totalorder %s155, %s156
    %p165 = scmp.eq.s32.totalorder %s19, 0
    %p166 = por %p164, %p165
    %p167 = scmp.ne.s32.totalorder %s155, %s156
    %p168 = scmp.eq.s32.totalorder %s20, 1
    %p169 = por %p167, %p168
    %p171 = scmp.ne.s32.totalorder %s156, %s170
    %p172 = scmp.eq.s32.totalorder %s20, 0
    %p173 = por %p171, %p172
    %s175 = sadd.s32 %s174, 1
    %p178 = scmp.eq.s32.totalorder %s14, 1
    %p179 = scmp.ne.s32.totalorder %s174, %s176
    %p180 = scmp.eq.s32.totalorder %s14, 0
    %p181 = por %p179, %p180
    %p182 = scmp.ne.s32.totalorder %s174, %s176
    %p183 = scmp.eq.s32.totalorder %s19, 1
    %p184 = por %p182, %p183
    %p185 = scmp.ne.s32.totalorder %s176, %s177
    %p186 = scmp.eq.s32.totalorder %s19, 0
    %p187 = por %p185, %p186
    %p188 = scmp.ne.s32.totalorder %s176, %s177
    %p189 = scmp.eq.s32.totalorder %s20, 1
    %p190 = por %p188, %p189
    %p192 = scmp.ne.s32.totalorder %s177, %s191
    %p193 = scmp.eq.s32.totalorder %s20, 0
    %p194 = por %p192, %p193
    %s195 = ssub.s32 %s14, %s21
    %p196 = scmp.eq.s32.totalorder %s195, 0
    %s198 = sadd.s32 %s197, 1
    %s199 = scalar_select %p196, %s197, %s198
    %p202 = pneg %p196
    %p203 = scmp.eq.s32.totalorder %s14, 1
    %p204 = por %p202, %p203
    %p205 = scmp.ne.s32.totalorder %s197, %s200
    %p206 = scmp.eq.s32.totalorder %s14, 0
    %p207 = por %p205, %p206
    %p208 = scmp.ne.s32.totalorder %s197, %s200
    %p209 = scmp.eq.s32.totalorder %s19, 1
    %p210 = por %p208, %p209
    %p211 = scmp.ne.s32.totalorder %s200, %s201
    %p212 = scmp.eq.s32.totalorder %s19, 0
    %p213 = por %p211, %p212
    %p214 = scmp.ne.s32.totalorder %s200, %s201
    %p215 = scmp.eq.s32.totalorder %s20, 1
    %p216 = por %p214, %p215
    %p218 = scmp.ne.s32.totalorder %s201, %s217
    %p219 = scmp.eq.s32.totalorder %s20, 0
    %p220 = por %p218, %p219
    %p221 = scmp.le.s32.totalorder 1, %s14
    %p222 = scmp.lt.s32.totalorder %s14, 3
    %p223 = pnand %p221, %p222
    %p224 = pneg %p223
    // Predicated region
    $region9: #{senet_forward.1} parent=5 // pred_check
      _
    $region10: #{senet_forward.1} parent=5 // pred_check_branch
      %226 = sbr.rel (%p223) target = $region12
    $region11: #{senet_forward.1} parent=5 // pred_region
      %s227 = ssub.s32 %s14, 1
      // Predicated region
      $region13: #{senet_forward.1} parent=11 // pred_check
        %p228 = pneg %p61
      $region14: #{senet_forward.1} parent=11 // pred_check_branch
        %230 = sbr.rel (%p228) target = $region16
      $region15: #{senet_forward.1} parent=11 // pred_region
        _
      $region16: #{senet_forward.1} parent=11 // pred_fallthru
        _
      // Predicated region
      $region17: #{senet_forward.1} parent=11 // pred_check
        %p231 = pneg %p82
      $region18: #{senet_forward.1} parent=11 // pred_check_branch
        %233 = sbr.rel (%p231) target = $region20
      $region19: #{senet_forward.1} parent=11 // pred_region
        _
      $region20: #{senet_forward.1} parent=11 // pred_fallthru
        _
      // Predicated region
      $region21: #{senet_forward.1} parent=11 // pred_check
        %p234 = pneg %p103
      $region22: #{senet_forward.1} parent=11 // pred_check_branch
        %236 = sbr.rel (%p234) target = $region24
      $region23: #{senet_forward.1} parent=11 // pred_region
        _
      $region24: #{senet_forward.1} parent=11 // pred_fallthru
        _
      // Predicated region
      $region25: #{senet_forward.1} parent=11 // pred_check
        %p237 = pneg %p124
      $region26: #{senet_forward.1} parent=11 // pred_check_branch
        %239 = sbr.rel (%p237) target = $region28
      $region27: #{senet_forward.1} parent=11 // pred_region
        _
      $region28: #{senet_forward.1} parent=11 // pred_fallthru
        _
      // Predicated region
      $region29: #{senet_forward.1} parent=11 // pred_check
        %p240 = pneg %p145
      $region30: #{senet_forward.1} parent=11 // pred_check_branch
        %242 = sbr.rel (%p240) target = $region32
      $region31: #{senet_forward.1} parent=11 // pred_region
        _
      $region32: #{senet_forward.1} parent=11 // pred_fallthru
        _
      // Predicated region
      $region33: #{senet_forward.1} parent=11 // pred_check
        %p243 = pneg %p166
      $region34: #{senet_forward.1} parent=11 // pred_check_branch
        %245 = sbr.rel (%p243) target = $region36
      $region35: #{senet_forward.1} parent=11 // pred_region
        _
      $region36: #{senet_forward.1} parent=11 // pred_fallthru
        _
      // Predicated region
      $region37: #{senet_forward.1} parent=11 // pred_check
        %p246 = pneg %p187
      $region38: #{senet_forward.1} parent=11 // pred_check_branch
        %248 = sbr.rel (%p246) target = $region40
      $region39: #{senet_forward.1} parent=11 // pred_region
        _
      $region40: #{senet_forward.1} parent=11 // pred_fallthru
        _
    $region12: #{senet_forward.1} parent=5 // pred_fallthru
      _
    %p249 = scmp.lt.s32.totalorder %s14, 2
    // Predicated region
    $region41: #{senet_forward.1} parent=5 // pred_check
      %p250 = pneg %p249
    $region42: #{senet_forward.1} parent=5 // pred_check_branch
      %252 = sbr.rel (%p250) target = $region44
    $region43: #{senet_forward.1} parent=5 // pred_region
      // Predicated region
      $region45: #{senet_forward.1} parent=43 // pred_check
        %p253 = pneg %p34
      $region46: #{senet_forward.1} parent=43 // pred_check_branch
        %255 = sbr.rel (%p253) target = $region48
      $region47: #{senet_forward.1} parent=43 // pred_region
        %p256 = scmp.lt.s32.totalorder %s14, 1
        %s257 = scalar_select %p256, %s14, 1
        %s258 = smul.addr %s257, 3
        %s259 = smul.addr %s258, 2
        %s260 = scalar_lea.vmem %s0, %s259
      $region48: #{senet_forward.1} parent=43 // pred_fallthru
        _
    $region44: #{senet_forward.1} parent=5 // pred_fallthru
      _
    %p261 = scmp.le.s32.totalorder 1, %s14
    %p262 = scmp.lt.s32.totalorder %s14, 3
    %p263 = pnand %p261, %p262
    %p264 = pneg %p263
    // Predicated region
    $region49: #{senet_forward.1} parent=5 // pred_check
      _
    $region50: #{senet_forward.1} parent=5 // pred_check_branch
      %266 = sbr.rel (%p263) target = $region52
    $region51: #{senet_forward.1} parent=5 // pred_region
      %s267 = ssub.s32 %s14, 1
      %p268 = scmp.lt.s32.totalorder %s19, 1
      %s269 = scalar_select %p268, %s19, 1
      %s270 = smul.addr %s269, 3
      %s271 = smul.addr %s270, 2
      %s272 = scalar_lea.vmem %s0, %s271
      %p273 = pneg %p40
      %p274 = pneg %p37
      %p275 = pneg %p61
      %p276 = pneg %p58
      %p277 = pneg %p82
      %p278 = pneg %p79
      %p279 = pneg %p103
      %p280 = pneg %p100
      %p281 = pneg %p124
      %p282 = pneg %p121
      %p283 = pneg %p145
      %p284 = pneg %p142
      %p285 = pneg %p166
      %p286 = pneg %p163
      %p287 = pneg %p187
      %p288 = pneg %p184
      %p289 = pneg %p213
      %p290 = pneg %p210
      %p291 = scmp.lt.s32.totalorder %s19, 1
      %s292 = scalar_select %p291, %s19, 1
      %s293 = smul.addr %s292, 3
      %s294 = smul.addr %s293, 8
      %s295 = scalar_lea.vmem %s8, %s294
      %p296 = scmp.lt.s32.totalorder %s19, 1
      %s297 = scalar_select %p296, %s19, 1
      %s298 = smul.addr %s297, 3
      %s299 = smul.addr %s298, 2
      %s300 = scalar_lea.vmem %s0, %s299
      %p301 = scmp.lt.s32.totalorder %s19, 1
      %s302 = scalar_select %p301, %s19, 1
      %s303 = smul.addr %s302, 3
      %s304 = smul.addr %s303, 8
      %s305 = scalar_lea.vmem %s8, %s304
      %v307 = vld [vmem:[%s300] sm:$0x3f]
      %v308 = vld [vmem:[%s1] sm:$0xf]
      %s309 = scalar_lea.vmem %s1, 4
      %v310 = vld [vmem:[%s309] sm:$0xf]
      %312 = vst [vmem:[#allocation1] ss:$4 sm:$0xff] %v307
      %v313 = vld.sshfl [vmem:[#allocation1] sm:$0xff pattern:$0x73625140]
      %v315 = vld.sshfl [vmem:[#allocation1 + $0x8] sm:$0xff pattern:$0x73625140]
      %v317 = vld.sshfl [vmem:[#allocation1 + $0x10] sm:$0xff pattern:$0x73625140]
      %319 = vrot.lane.b32.xlu0 %v313, 127
      %v320 = vpop.permute.xlu0 %319
      %321 = vrot.lane.b32.xlu0 %v315, 127
      %v322 = vpop.permute.xlu0 %321
      %323 = vrot.lane.b32.xlu0 %v317, 127
      %v324 = vpop.permute.xlu0 %323
      %vm325 = vcmask 1039360
      %v326 = vsel %vm325, %v320, %v322
      %v327 = vsel %vm325, %v322, %v324
      %vm328 = vcmask 31744
      %v330 = vsel %vm328, %v310, 0
      %vm332 = vcmask 1041408
      %v334 = vsel %vm332, %v326, 0
      %v337 = vsel %vm332, %v327, 0
      %v340 = vsel %vm332, %v324, 0
      %342 = vmatpush.bf16.msra.mxu0 0
      %343 = vmatpush.bf16.msra.mxu0 0
      %344 = vmatpush.bf16.msra.mxu0 0
      %345 = vmatpush.bf16.msra.mxu0 0
      %346 = vmatpush.bf16.msra.mxu0 0
      %347 = vmatpush.bf16.msra.mxu0 0
      %348 = vmatpush.bf16.msra.mxu0 0
      %349 = vmatpush.bf16.msra.mxu0 %v334
      %350 = vmatmul.bf16.gmra.mxu0 %v330
      %v351 = vpop.f32.mrf.mxu0
      %v352 = vadd.f32 0.0, %v351
      %v353 = vpop.f32.mrf.mxu0
      %354 = vdwg.mxu0
      %355 = vmatpush.bf16.msra.mxu0 0
      %356 = vmatpush.bf16.msra.mxu0 0
      %357 = vmatpush.bf16.msra.mxu0 0
      %358 = vmatpush.bf16.msra.mxu0 0
      %359 = vmatpush.bf16.msra.mxu0 0
      %360 = vmatpush.bf16.msra.mxu0 0
      %361 = vmatpush.bf16.msra.mxu0 0
      %362 = vmatpush.bf16.msra.mxu0 %v337
      %363 = vmatmul.bf16.gmra.mxu0 %v330
      %v364 = vpop.f32.mrf.mxu0
      %v365 = vadd.f32 0.0, %v364
      %v366 = vpop.f32.mrf.mxu0
      %367 = vdwg.mxu0
      %368 = vmatpush.bf16.msra.mxu0 0
      %369 = vmatpush.bf16.msra.mxu0 0
      %370 = vmatpush.bf16.msra.mxu0 0
      %371 = vmatpush.bf16.msra.mxu0 0
      %372 = vmatpush.bf16.msra.mxu0 0
      %373 = vmatpush.bf16.msra.mxu0 0
      %374 = vmatpush.bf16.msra.mxu0 0
      %375 = vmatpush.bf16.msra.mxu0 %v340
      %376 = vmatmul.bf16.gmra.mxu0 %v330
      %v377 = vpop.f32.mrf.mxu0
      %v378 = vadd.f32 0.0, %v377
      %v379 = vpop.f32.mrf.mxu0
      %380 = vdwg.mxu0
      %381 = vst [vmem:[#allocation1] ss:$4 sm:$0xff] %v307
      %v382 = vld.sshfl [vmem:[#allocation1] sm:$0xff pattern:$0x73625140]
      %v383 = vld.sshfl [vmem:[#allocation1 + $0x8] sm:$0xff pattern:$0x73625140]
      %v384 = vld.sshfl [vmem:[#allocation1 + $0x10] sm:$0xff pattern:$0x73625140]
      %v386 = vsel %vm328, %v308, 0
      %v388 = vsel %vm332, %v382, 0
      %v390 = vsel %vm332, %v383, 0
      %v392 = vsel %vm332, %v384, 0
      %394 = vmatpush.bf16.msra.mxu0 0
      %395 = vmatpush.bf16.msra.mxu0 0
      %396 = vmatpush.bf16.msra.mxu0 0
      %397 = vmatpush.bf16.msra.mxu0 0
      %398 = vmatpush.bf16.msra.mxu0 0
      %399 = vmatpush.bf16.msra.mxu0 0
      %400 = vmatpush.bf16.msra.mxu0 0
      %401 = vmatpush.bf16.msra.mxu0 %v388
      %402 = vmatmul.bf16.gmra.mxu0 %v386
      %v403 = vpop.f32.mrf.mxu0
      %v404 = vadd.f32 %v352, %v403
      %v405 = vpop.f32.mrf.mxu0
      %406 = vdwg.mxu0
      %407 = vmatpush.bf16.msra.mxu0 0
      %408 = vmatpush.bf16.msra.mxu0 0
      %409 = vmatpush.bf16.msra.mxu0 0
      %410 = vmatpush.bf16.msra.mxu0 0
      %411 = vmatpush.bf16.msra.mxu0 0
      %412 = vmatpush.bf16.msra.mxu0 0
      %413 = vmatpush.bf16.msra.mxu0 0
      %414 = vmatpush.bf16.msra.mxu0 %v390
      %415 = vmatmul.bf16.gmra.mxu0 %v386
      %v416 = vpop.f32.mrf.mxu0
      %v417 = vadd.f32 %v365, %v416
      %v418 = vpop.f32.mrf.mxu0
      %419 = vdwg.mxu0
      %420 = vmatpush.bf16.msra.mxu0 0
      %421 = vmatpush.bf16.msra.mxu0 0
      %422 = vmatpush.bf16.msra.mxu0 0
      %423 = vmatpush.bf16.msra.mxu0 0
      %424 = vmatpush.bf16.msra.mxu0 0
      %425 = vmatpush.bf16.msra.mxu0 0
      %426 = vmatpush.bf16.msra.mxu0 0
      %427 = vmatpush.bf16.msra.mxu0 %v392
      %428 = vmatmul.bf16.gmra.mxu0 %v386
      %v429 = vpop.f32.mrf.mxu0
      %v430 = vadd.f32 %v378, %v429
      %v431 = vpop.f32.mrf.mxu0
      %432 = vdwg.mxu0
      %v433 = vld [vmem:[%s300] sm:$0x3f]
      %s434 = scalar_lea.vmem %s1, 8
      %v435 = vld [vmem:[%s434] sm:$0xf]
      %437 = vst [vmem:[#allocation1] ss:$4 sm:$0xff] %v433
      %v438 = vld.sshfl [vmem:[#allocation1] sm:$0xff pattern:$0x73625140]
      %v440 = vld.sshfl [vmem:[#allocation1 + $0x8] sm:$0xff pattern:$0x73625140]
      %v442 = vld.sshfl [vmem:[#allocation1 + $0x10] sm:$0xff pattern:$0x73625140]
      %444 = vrot.lane.b32.xlu0 %v438, 126
      %v445 = vpop.permute.xlu0 %444
      %446 = vrot.lane.b32.xlu0 %v440, 126
      %v447 = vpop.permute.xlu0 %446
      %448 = vrot.lane.b32.xlu0 %v442, 126
      %v449 = vpop.permute.xlu0 %448
      %vm450 = vcmask 1031168
      %v451 = vsel %vm450, %v445, %v447
      %v452 = vsel %vm450, %v447, %v449
      %v454 = vsel %vm328, %v435, 0
      %v457 = vsel %vm332, %v451, 0
      %v460 = vsel %vm332, %v452, 0
      %v463 = vsel %vm332, %v449, 0
      %465 = vmatpush.bf16.msra.mxu0 0
      %466 = vmatpush.bf16.msra.mxu0 0
      %467 = vmatpush.bf16.msra.mxu0 0
      %468 = vmatpush.bf16.msra.mxu0 0
      %469 = vmatpush.bf16.msra.mxu0 0
      %470 = vmatpush.bf16.msra.mxu0 0
      %471 = vmatpush.bf16.msra.mxu0 0
      %472 = vmatpush.bf16.msra.mxu0 %v457
      %473 = vmatmul.bf16.gmra.mxu0 %v454
      %v474 = vpop.f32.mrf.mxu0
      %v475 = vadd.f32 0.0, %v474
      %v476 = vpop.f32.mrf.mxu0
      %477 = vdwg.mxu0
      %478 = vmatpush.bf16.msra.mxu0 0
      %479 = vmatpush.bf16.msra.mxu0 0
      %480 = vmatpush.bf16.msra.mxu0 0
      %481 = vmatpush.bf16.msra.mxu0 0
      %482 = vmatpush.bf16.msra.mxu0 0
      %483 = vmatpush.bf16.msra.mxu0 0
      %484 = vmatpush.bf16.msra.mxu0 0
      %485 = vmatpush.bf16.msra.mxu0 %v460
      %486 = vmatmul.bf16.gmra.mxu0 %v454
      %v487 = vpop.f32.mrf.mxu0
      %v488 = vadd.f32 0.0, %v487
      %v489 = vpop.f32.mrf.mxu0
      %490 = vdwg.mxu0
      %491 = vmatpush.bf16.msra.mxu0 0
      %492 = vmatpush.bf16.msra.mxu0 0
      %493 = vmatpush.bf16.msra.mxu0 0
      %494 = vmatpush.bf16.msra.mxu0 0
      %495 = vmatpush.bf16.msra.mxu0 0
      %496 = vmatpush.bf16.msra.mxu0 0
      %497 = vmatpush.bf16.msra.mxu0 0
      %498 = vmatpush.bf16.msra.mxu0 %v463
      %499 = vmatmul.bf16.gmra.mxu0 %v454
      %v500 = vpop.f32.mrf.mxu0
      %v501 = vadd.f32 0.0, %v500
      %v502 = vpop.f32.mrf.mxu0
      %503 = vdwg.mxu0
      %v504 = vadd.f32 %v404, %v475
      %v505 = vadd.f32 %v417, %v488
      %v506 = vadd.f32 %v430, %v501
      %v507 = vld [vmem:[%s300] sm:$0x3f]
      %s508 = scalar_lea.vmem %s1, 12
      %v509 = vld [vmem:[%s508] sm:$0xf]
      %511 = vst [vmem:[#allocation1] ss:$4 sm:$0xff] %v507
      %v512 = vld.sshfl [vmem:[#allocation1] sm:$0xff pattern:$0x73625140]
      %v514 = vld.sshfl [vmem:[#allocation1 + $0x8] sm:$0xff pattern:$0x73625140]
      %v516 = vld.sshfl [vmem:[#allocation1 + $0x10] sm:$0xff pattern:$0x73625140]
      %518 = vrot.lane.b32.xlu0 %v512, 110
      %v519 = vpop.permute.xlu0 %518
      %520 = vrot.lane.b32.xlu0 %v514, 110
      %v521 = vpop.permute.xlu0 %520
      %522 = vrot.lane.b32.xlu0 %v516, 110
      %v523 = vpop.permute.xlu0 %522
      %vm524 = vcmask 900096
      %v525 = vsel %vm524, %v519, %v521
      %v526 = vsel %vm524, %v521, %v523
      %v528 = vsel %vm328, %v509, 0
      %v531 = vsel %vm332, %v525, 0
      %v534 = vsel %vm332, %v526, 0
      %v537 = vsel %vm332, %v523, 0
      %539 = vmatpush.bf16.msra.mxu0 0
      %540 = vmatpush.bf16.msra.mxu0 0
      %541 = vmatpush.bf16.msra.mxu0 0
      %542 = vmatpush.bf16.msra.mxu0 0
      %543 = vmatpush.bf16.msra.mxu0 0
      %544 = vmatpush.bf16.msra.mxu0 0
      %545 = vmatpush.bf16.msra.mxu0 0
      %546 = vmatpush.bf16.msra.mxu0 %v531
      %547 = vmatmul.bf16.gmra.mxu0 %v528
      %v548 = vpop.f32.mrf.mxu0
      %v549 = vadd.f32 0.0, %v548
      %v550 = vpop.f32.mrf.mxu0
      %551 = vdwg.mxu0
      %552 = vmatpush.bf16.msra.mxu0 0
      %553 = vmatpush.bf16.msra.mxu0 0
      %554 = vmatpush.bf16.msra.mxu0 0
      %555 = vmatpush.bf16.msra.mxu0 0
      %556 = vmatpush.bf16.msra.mxu0 0
      %557 = vmatpush.bf16.msra.mxu0 0
      %558 = vmatpush.bf16.msra.mxu0 0
      %559 = vmatpush.bf16.msra.mxu0 %v534
      %560 = vmatmul.bf16.gmra.mxu0 %v528
      %v561 = vpop.f32.mrf.mxu0
      %v562 = vadd.f32 0.0, %v561
      %v563 = vpop.f32.mrf.mxu0
      %564 = vdwg.mxu0
      %565 = vmatpush.bf16.msra.mxu0 0
      %566 = vmatpush.bf16.msra.mxu0 0
      %567 = vmatpush.bf16.msra.mxu0 0
      %568 = vmatpush.bf16.msra.mxu0 0
      %569 = vmatpush.bf16.msra.mxu0 0
      %570 = vmatpush.bf16.msra.mxu0 0
      %571 = vmatpush.bf16.msra.mxu0 0
      %572 = vmatpush.bf16.msra.mxu0 %v537
      %573 = vmatmul.bf16.gmra.mxu0 %v528
      %v574 = vpop.f32.mrf.mxu0
      %v575 = vadd.f32 0.0, %v574
      %v576 = vpop.f32.mrf.mxu0
      %577 = vdwg.mxu0
      %v578 = vadd.f32 %v504, %v549
      %v579 = vadd.f32 %v505, %v562
      %v580 = vadd.f32 %v506, %v575
      %v581 = vld [vmem:[%s300] sm:$0x3f]
      %s582 = scalar_lea.vmem %s1, 16
      %v583 = vld [vmem:[%s582] sm:$0xf]
      %585 = vst [vmem:[#allocation1] ss:$4 sm:$0xff] %v581
      %v586 = vld.sshfl [vmem:[#allocation1] sm:$0xff pattern:$0x73625140]
      %v588 = vld.sshfl [vmem:[#allocation1 + $0x8] sm:$0xff pattern:$0x73625140]
      %v590 = vld.sshfl [vmem:[#allocation1 + $0x10] sm:$0xff pattern:$0x73625140]
      %592 = vrot.lane.b32.xlu0 %v586, 109
      %v593 = vpop.permute.xlu0 %592
      %594 = vrot.lane.b32.xlu0 %v588, 109
      %v595 = vpop.permute.xlu0 %594
      %596 = vrot.lane.b32.xlu0 %v590, 109
      %v597 = vpop.permute.xlu0 %596
      %vm598 = vcmask 891904
      %v599 = vsel %vm598, %v593, %v595
      %v600 = vsel %vm598, %v595, %v597
      %v602 = vsel %vm328, %v583, 0
      %v605 = vsel %vm332, %v599, 0
      %v608 = vsel %vm332, %v600, 0
      %v611 = vsel %vm332, %v597, 0
      %613 = vmatpush.bf16.msra.mxu0 0
      %614 = vmatpush.bf16.msra.mxu0 0
      %615 = vmatpush.bf16.msra.mxu0 0
      %616 = vmatpush.bf16.msra.mxu0 0
      %617 = vmatpush.bf16.msra.mxu0 0
      %618 = vmatpush.bf16.msra.mxu0 0
      %619 = vmatpush.bf16.msra.mxu0 0
      %620 = vmatpush.bf16.msra.mxu0 %v605
      %621 = vmatmul.bf16.gmra.mxu0 %v602
      %v622 = vpop.f32.mrf.mxu0
      %v623 = vadd.f32 0.0, %v622
      %v624 = vpop.f32.mrf.mxu0
      %625 = vdwg.mxu0
      %626 = vmatpush.bf16.msra.mxu0 0
      %627 = vmatpush.bf16.msra.mxu0 0
      %628 = vmatpush.bf16.msra.mxu0 0
      %629 = vmatpush.bf16.msra.mxu0 0
      %630 = vmatpush.bf16.msra.mxu0 0
      %631 = vmatpush.bf16.msra.mxu0 0
      %632 = vmatpush.bf16.msra.mxu0 0
      %633 = vmatpush.bf16.msra.mxu0 %v608
      %634 = vmatmul.bf16.gmra.mxu0 %v602
      %v635 = vpop.f32.mrf.mxu0
      %v636 = vadd.f32 0.0, %v635
      %v637 = vpop.f32.mrf.mxu0
      %638 = vdwg.mxu0
      %639 = vmatpush.bf16.msra.mxu0 0
      %640 = vmatpush.bf16.msra.mxu0 0
      %641 = vmatpush.bf16.msra.mxu0 0
      %642 = vmatpush.bf16.msra.mxu0 0
      %643 = vmatpush.bf16.msra.mxu0 0
      %644 = vmatpush.bf16.msra.mxu0 0
      %645 = vmatpush.bf16.msra.mxu0 0
      %646 = vmatpush.bf16.msra.mxu0 %v611
      %647 = vmatmul.bf16.gmra.mxu0 %v602
      %v648 = vpop.f32.mrf.mxu0
      %v649 = vadd.f32 0.0, %v648
      %v650 = vpop.f32.mrf.mxu0
      %651 = vdwg.mxu0
      %v652 = vadd.f32 %v578, %v623
      %v653 = vadd.f32 %v579, %v636
      %v654 = vadd.f32 %v580, %v649
      %v655 = vld [vmem:[%s300] sm:$0x3f]
      %s656 = scalar_lea.vmem %s1, 20
      %v657 = vld [vmem:[%s656] sm:$0xf]
      %659 = vst [vmem:[#allocation1] ss:$4 sm:$0xff] %v655
      %v660 = vld.sshfl [vmem:[#allocation1] sm:$0xff pattern:$0x73625140]
      %v662 = vld.sshfl [vmem:[#allocation1 + $0x8] sm:$0xff pattern:$0x73625140]
      %v664 = vld.sshfl [vmem:[#allocation1 + $0x10] sm:$0xff pattern:$0x73625140]
      %666 = vrot.lane.b32.xlu0 %v660, 108
      %v667 = vpop.permute.xlu0 %666
      %668 = vrot.lane.b32.xlu0 %v662, 108
      %v669 = vpop.permute.xlu0 %668
      %670 = vrot.lane.b32.xlu0 %v664, 108
      %v671 = vpop.permute.xlu0 %670
      %vm672 = vcmask 883712
      %v673 = vsel %vm672, %v667, %v669
      %v674 = vsel %vm672, %v669, %v671
      %v676 = vsel %vm328, %v657, 0
      %v679 = vsel %vm332, %v673, 0
      %v682 = vsel %vm332, %v674, 0
      %v685 = vsel %vm332, %v671, 0
      %687 = vmatpush.bf16.msra.mxu0 0
      %688 = vmatpush.bf16.msra.mxu0 0
      %689 = vmatpush.bf16.msra.mxu0 0
      %690 = vmatpush.bf16.msra.mxu0 0
      %691 = vmatpush.bf16.msra.mxu0 0
      %692 = vmatpush.bf16.msra.mxu0 0
      %693 = vmatpush.bf16.msra.mxu0 0
      %694 = vmatpush.bf16.msra.mxu0 %v679
      %695 = vmatmul.bf16.gmra.mxu0 %v676
      %v696 = vpop.f32.mrf.mxu0
      %v697 = vadd.f32 0.0, %v696
      %v698 = vpop.f32.mrf.mxu0
      %699 = vdwg.mxu0
      %700 = vmatpush.bf16.msra.mxu0 0
      %701 = vmatpush.bf16.msra.mxu0 0
      %702 = vmatpush.bf16.msra.mxu0 0
      %703 = vmatpush.bf16.msra.mxu0 0
      %704 = vmatpush.bf16.msra.mxu0 0
      %705 = vmatpush.bf16.msra.mxu0 0
      %706 = vmatpush.bf16.msra.mxu0 0
      %707 = vmatpush.bf16.msra.mxu0 %v682
      %708 = vmatmul.bf16.gmra.mxu0 %v676
      %v709 = vpop.f32.mrf.mxu0
      %v710 = vadd.f32 0.0, %v709
      %v711 = vpop.f32.mrf.mxu0
      %712 = vdwg.mxu0
      %713 = vmatpush.bf16.msra.mxu0 0
      %714 = vmatpush.bf16.msra.mxu0 0
      %715 = vmatpush.bf16.msra.mxu0 0
      %716 = vmatpush.bf16.msra.mxu0 0
      %717 = vmatpush.bf16.msra.mxu0 0
      %718 = vmatpush.bf16.msra.mxu0 0
      %719 = vmatpush.bf16.msra.mxu0 0
      %720 = vmatpush.bf16.msra.mxu0 %v685
      %721 = vmatmul.bf16.gmra.mxu0 %v676
      %v722 = vpop.f32.mrf.mxu0
      %v723 = vadd.f32 0.0, %v722
      %v724 = vpop.f32.mrf.mxu0
      %725 = vdwg.mxu0
      %v726 = vadd.f32 %v652, %v697
      %v727 = vadd.f32 %v653, %v710
      %v728 = vadd.f32 %v654, %v723
      %v729 = vld [vmem:[%s300] sm:$0x3f]
      %s730 = scalar_lea.vmem %s1, 24
      %v731 = vld [vmem:[%s730] sm:$0xf]
      %733 = vst [vmem:[#allocation1] ss:$4 sm:$0xff] %v729
      %v734 = vld.sshfl [vmem:[#allocation1] sm:$0xff pattern:$0x73625140]
      %v736 = vld.sshfl [vmem:[#allocation1 + $0x8] sm:$0xff pattern:$0x73625140]
      %v738 = vld.sshfl [vmem:[#allocation1 + $0x10] sm:$0xff pattern:$0x73625140]
      %740 = vrot.lane.b32.xlu0 %v734, 92
      %v741 = vpop.permute.xlu0 %740
      %742 = vrot.lane.b32.xlu0 %v736, 92
      %v743 = vpop.permute.xlu0 %742
      %744 = vrot.lane.b32.xlu0 %v738, 92
      %v745 = vpop.permute.xlu0 %744
      %vm746 = vcmask 752640
      %v747 = vsel %vm746, %v741, %v743
      %v748 = vsel %vm746, %v743, %v745
      %v750 = vsel %vm328, %v731, 0
      %v753 = vsel %vm332, %v747, 0
      %v756 = vsel %vm332, %v748, 0
      %v759 = vsel %vm332, %v745, 0
      %761 = vmatpush.bf16.msra.mxu0 0
      %762 = vmatpush.bf16.msra.mxu0 0
      %763 = vmatpush.bf16.msra.mxu0 0
      %764 = vmatpush.bf16.msra.mxu0 0
      %765 = vmatpush.bf16.msra.mxu0 0
      %766 = vmatpush.bf16.msra.mxu0 0
      %767 = vmatpush.bf16.msra.mxu0 0
      %768 = vmatpush.bf16.msra.mxu0 %v753
      %769 = vmatmul.bf16.gmra.mxu0 %v750
      %v770 = vpop.f32.mrf.mxu0
      %v771 = vadd.f32 0.0, %v770
      %v772 = vpop.f32.mrf.mxu0
      %773 = vdwg.mxu0
      %774 = vmatpush.bf16.msra.mxu0 0
      %775 = vmatpush.bf16.msra.mxu0 0
      %776 = vmatpush.bf16.msra.mxu0 0
      %777 = vmatpush.bf16.msra.mxu0 0
      %778 = vmatpush.bf16.msra.mxu0 0
      %779 = vmatpush.bf16.msra.mxu0 0
      %780 = vmatpush.bf16.msra.mxu0 0
      %781 = vmatpush.bf16.msra.mxu0 %v756
      %782 = vmatmul.bf16.gmra.mxu0 %v750
      %v783 = vpop.f32.mrf.mxu0
      %v784 = vadd.f32 0.0, %v783
      %v785 = vpop.f32.mrf.mxu0
      %786 = vdwg.mxu0
      %787 = vmatpush.bf16.msra.mxu0 0
      %788 = vmatpush.bf16.msra.mxu0 0
      %789 = vmatpush.bf16.msra.mxu0 0
      %790 = vmatpush.bf16.msra.mxu0 0
      %791 = vmatpush.bf16.msra.mxu0 0
      %792 = vmatpush.bf16.msra.mxu0 0
      %793 = vmatpush.bf16.msra.mxu0 0
      %794 = vmatpush.bf16.msra.mxu0 %v759
      %795 = vmatmul.bf16.gmra.mxu0 %v750
      %v796 = vpop.f32.mrf.mxu0
      %v797 = vadd.f32 0.0, %v796
      %v798 = vpop.f32.mrf.mxu0
      %799 = vdwg.mxu0
      %v800 = vadd.f32 %v726, %v771
      %v801 = vadd.f32 %v727, %v784
      %v802 = vadd.f32 %v728, %v797
      %v803 = vld [vmem:[%s300] sm:$0x3f]
      %s804 = scalar_lea.vmem %s1, 28
      %v805 = vld [vmem:[%s804] sm:$0xf]
      %807 = vst [vmem:[#allocation1] ss:$4 sm:$0xff] %v803
      %v808 = vld.sshfl [vmem:[#allocation1] sm:$0xff pattern:$0x73625140]
      %v810 = vld.sshfl [vmem:[#allocation1 + $0x8] sm:$0xff pattern:$0x73625140]
      %v812 = vld.sshfl [vmem:[#allocation1 + $0x10] sm:$0xff pattern:$0x73625140]
      %814 = vrot.lane.b32.xlu0 %v808, 91
      %v815 = vpop.permute.xlu0 %814
      %816 = vrot.lane.b32.xlu0 %v810, 91
      %v817 = vpop.permute.xlu0 %816
      %818 = vrot.lane.b32.xlu0 %v812, 91
      %v819 = vpop.permute.xlu0 %818
      %vm820 = vcmask 744448
      %v821 = vsel %vm820, %v815, %v817
      %v822 = vsel %vm820, %v817, %v819
      %v824 = vsel %vm328, %v805, 0
      %v827 = vsel %vm332, %v821, 0
      %v830 = vsel %vm332, %v822, 0
      %v833 = vsel %vm332, %v819, 0
      %835 = vmatpush.bf16.msra.mxu0 0
      %836 = vmatpush.bf16.msra.mxu0 0
      %837 = vmatpush.bf16.msra.mxu0 0
      %838 = vmatpush.bf16.msra.mxu0 0
      %839 = vmatpush.bf16.msra.mxu0 0
      %840 = vmatpush.bf16.msra.mxu0 0
      %841 = vmatpush.bf16.msra.mxu0 0
      %842 = vmatpush.bf16.msra.mxu0 %v827
      %843 = vmatmul.bf16.gmra.mxu0 %v824
      %v844 = vpop.f32.mrf.mxu0
      %v845 = vadd.f32 0.0, %v844
      %v846 = vpop.f32.mrf.mxu0
      %847 = vdwg.mxu0
      %848 = vmatpush.bf16.msra.mxu0 0
      %849 = vmatpush.bf16.msra.mxu0 0
      %850 = vmatpush.bf16.msra.mxu0 0
      %851 = vmatpush.bf16.msra.mxu0 0
      %852 = vmatpush.bf16.msra.mxu0 0
      %853 = vmatpush.bf16.msra.mxu0 0
      %854 = vmatpush.bf16.msra.mxu0 0
      %855 = vmatpush.bf16.msra.mxu0 %v830
      %856 = vmatmul.bf16.gmra.mxu0 %v824
      %v857 = vpop.f32.mrf.mxu0
      %v858 = vadd.f32 0.0, %v857
      %v859 = vpop.f32.mrf.mxu0
      %860 = vdwg.mxu0
      %861 = vmatpush.bf16.msra.mxu0 0
      %862 = vmatpush.bf16.msra.mxu0 0
      %863 = vmatpush.bf16.msra.mxu0 0
      %864 = vmatpush.bf16.msra.mxu0 0
      %865 = vmatpush.bf16.msra.mxu0 0
      %866 = vmatpush.bf16.msra.mxu0 0
      %867 = vmatpush.bf16.msra.mxu0 0
      %868 = vmatpush.bf16.msra.mxu0 %v833
      %869 = vmatmul.bf16.gmra.mxu0 %v824
      %v870 = vpop.f32.mrf.mxu0
      %v871 = vadd.f32 0.0, %v870
      %v872 = vpop.f32.mrf.mxu0
      %873 = vdwg.mxu0
      %v874 = vadd.f32 %v800, %v845
      %v875 = vadd.f32 %v801, %v858
      %v876 = vadd.f32 %v802, %v871
      %v877 = vld [vmem:[%s300] sm:$0x3f]
      %s878 = scalar_lea.vmem %s1, 32
      %v879 = vld [vmem:[%s878] sm:$0xf]
      %881 = vst [vmem:[#allocation1] ss:$4 sm:$0xff] %v877
      %v882 = vld.sshfl [vmem:[#allocation1] sm:$0xff pattern:$0x73625140]
      %v884 = vld.sshfl [vmem:[#allocation1 + $0x8] sm:$0xff pattern:$0x73625140]
      %v886 = vld.sshfl [vmem:[#allocation1 + $0x10] sm:$0xff pattern:$0x73625140]
      %888 = vrot.lane.b32.xlu0 %v882, 90
      %v889 = vpop.permute.xlu0 %888
      %890 = vrot.lane.b32.xlu0 %v884, 90
      %v891 = vpop.permute.xlu0 %890
      %892 = vrot.lane.b32.xlu0 %v886, 90
      %v893 = vpop.permute.xlu0 %892
      %vm894 = vcmask 736256
      %v895 = vsel %vm894, %v889, %v891
      %v896 = vsel %vm894, %v891, %v893
      %v898 = vsel %vm328, %v879, 0
      %v901 = vsel %vm332, %v895, 0
      %v904 = vsel %vm332, %v896, 0
      %v907 = vsel %vm332, %v893, 0
      %909 = vmatpush.bf16.msra.mxu0 0
      %910 = vmatpush.bf16.msra.mxu0 0
      %911 = vmatpush.bf16.msra.mxu0 0
      %912 = vmatpush.bf16.msra.mxu0 0
      %913 = vmatpush.bf16.msra.mxu0 0
      %914 = vmatpush.bf16.msra.mxu0 0
      %915 = vmatpush.bf16.msra.mxu0 0
      %916 = vmatpush.bf16.msra.mxu0 %v901
      %917 = vmatmul.bf16.gmra.mxu0 %v898
      %v918 = vpop.f32.mrf.mxu0
      %v919 = vadd.f32 0.0, %v918
      %v920 = vpop.f32.mrf.mxu0
      %921 = vdwg.mxu0
      %922 = vmatpush.bf16.msra.mxu0 0
      %923 = vmatpush.bf16.msra.mxu0 0
      %924 = vmatpush.bf16.msra.mxu0 0
      %925 = vmatpush.bf16.msra.mxu0 0
      %926 = vmatpush.bf16.msra.mxu0 0
      %927 = vmatpush.bf16.msra.mxu0 0
      %928 = vmatpush.bf16.msra.mxu0 0
      %929 = vmatpush.bf16.msra.mxu0 %v904
      %930 = vmatmul.bf16.gmra.mxu0 %v898
      %v931 = vpop.f32.mrf.mxu0
      %v932 = vadd.f32 0.0, %v931
      %v933 = vpop.f32.mrf.mxu0
      %934 = vdwg.mxu0
      %935 = vmatpush.bf16.msra.mxu0 0
      %936 = vmatpush.bf16.msra.mxu0 0
      %937 = vmatpush.bf16.msra.mxu0 0
      %938 = vmatpush.bf16.msra.mxu0 0
      %939 = vmatpush.bf16.msra.mxu0 0
      %940 = vmatpush.bf16.msra.mxu0 0
      %941 = vmatpush.bf16.msra.mxu0 0
      %942 = vmatpush.bf16.msra.mxu0 %v907
      %943 = vmatmul.bf16.gmra.mxu0 %v898
      %v944 = vpop.f32.mrf.mxu0
      %v945 = vadd.f32 0.0, %v944
      %v946 = vpop.f32.mrf.mxu0
      %947 = vdwg.mxu0
      %v948 = vadd.f32 %v874, %v919
      %v949 = vadd.f32 %v875, %v932
      %v950 = vadd.f32 %v876, %v945
      %v951 = vld [vmem:[%s2] sm:$0xff]
      %953 = vset.pattern.permute.xlu0 0
      %954 = vperm.xlu0 %953, %v951
      %v955 = vpop.permute.xlu0 %954
      %v957 = vmul.f32 %v948, %v955
      %v958 = vmul.f32 %v949, %v955
      %v959 = vmul.f32 %v950, %v955
      %v960 = vld [vmem:[%s3] sm:$0xff]
      %962 = vset.pattern.permute.xlu0 0
      %963 = vperm.xlu0 %962, %v960
      %v964 = vpop.permute.xlu0 %963
      %v966 = vadd.f32 %v957, %v964
      %v967 = vadd.f32 %v958, %v964
      %v968 = vadd.f32 %v959, %v964
      %v969 = vmax.f32 %v966, 0.0
      %v970 = vmax.f32 %v967, 0.0
      %v971 = vmax.f32 %v968, 0.0
      %v972 = vld [vmem:[%s7] sm:$0x7]
      %v974 = vperm.slane %v972, 0
      %v975 = vperm.slane %v972, 1
      %v976 = vperm.slane %v972, 2
      %v980 = vmul.f32 %v969, %v974
      %v981 = vmul.f32 %v970, %v975
      %v982 = vmul.f32 %v971, %v976
      %v983 = vadd.f32 %v980, %v981
      %vm984 = vcmask 261120
      %v985 = vsel %vm984, %v982, 0.0
      %v986 = vadd.f32 %v983, %v985
      %987 = vadd.xlane.f32.xlu0 %v986
      %v988 = vpop.xlane.xlu0 %987
      %v989 = vld [vmem:[%s4] sm:$0xff]
      %vm990 = vcmask 64512
      %v992 = vsel %vm990, %v989, 0
      %994 = vmatpush.msra.mxu0 0.0
      %995 = vmatpush.msra.mxu0 0.0
      %996 = vmatpush.msra.mxu0 0.0
      %997 = vmatpush.msra.mxu0 0.0
      %998 = vmatpush.msra.mxu0 0.0
      %999 = vmatpush.msra.mxu0 0.0
      %1000 = vmatpush.msra.mxu0 0.0
      %1001 = vmatpush.msra.mxu0 0.0
      %1002 = vmatpush.msra.mxu0 0.0
      %1003 = vmatpush.msra.mxu0 0.0
      %1004 = vmatpush.msra.mxu0 0.0
      %1005 = vmatpush.msra.mxu0 0.0
      %1006 = vmatpush.msra.mxu0 0.0
      %1007 = vmatpush.msra.mxu0 0.0
      %1008 = vmatpush.msra.mxu0 0.0
      %1009 = vmatpush.msra.mxu0 %v988
      %1010 = vmatmul.f32.gmra.mxu0 %v992
      %v1011 = vpop.f32.mrf.mxu0
      %v1012 = vadd.f32 0.0, %v1011
      %1013 = vdwg.mxu0
      %v1014 = vld [vmem:[%s5] sm:$0xff]
      %v1015 = vmul.f32 %v1012, %v1014
      %v1016 = vld [vmem:[%s6] sm:$0xff]
      %v1017 = vadd.f32 %v1015, %v1016
      %v1018 = vxor.u32 %v1017, 2147483648
      %v1019 = vmul.f32 %v1018, 1.442695
      %v1020 = vpow.pop %v1019
      %v1021 = vadd.f32 %v1020, 1.0
      %v1022 = vrcp.pop %v1021
      %v1023 = vmul.f32 %v1021, %v1022
      %v1024 = vsub.f32 1.0, %v1023
      %v1025 = vmul.f32 %v1022, %v1024
      %v1026 = vadd.f32 %v1022, %v1025
      %vm1027 = vweird.f32 %v1021
      %vm1028 = vweird.f32 %v1022
      %vm1029 = vmor %vm1027, %vm1028
      %v1030 = vsel %vm1029, %v1022, %v1026
      %v1031 = vand.u32 2147483647, %v1021
      %vm1032 = vcmp.eq.f32.partialorder %v1031, 8.507059e+37
      %v1033 = vand.u32 %v1021, 2147483648
      %v1034 = vor.u32 1.1754944e-38, %v1033
      %v1035 = vsel %vm1032, %v1034, %v1030
      %v1036 = vmul.f32 1.0, %v1035
      %1038 = vset.pattern.permute.xlu0 0
      %1039 = vperm.xlu0 %1038, %v1036
      %v1040 = vpop.permute.xlu0 %1039
      %v1042 = vmul.f32 %v969, %v1040
      %v1043 = vmul.f32 %v970, %v1040
      %v1044 = vmul.f32 %v971, %v1040
      %1045 = vst [vmem:[%s305] sm:$0xff] %v1042
      %1046 = vst [vmem:[%s305 + $0x8] sm:$0xff] %v1043
      %1047 = vst.msk [vmem:[%s305 + $0x10] sm:$0xff] %vm984, %v1044
      %p1048 = scmp.lt.s32.totalorder %s19, 1
      %s1049 = scalar_select %p1048, %s19, 1
      %s1050 = smul.addr %s1049, 3
      %s1051 = smul.addr %s1050, 8
      %s1052 = scalar_lea.vmem %s8, %s1051
      // Predicated region
      $region53: #{senet_forward.1} parent=51 // pred_check
        %p1053 = pneg %p210
      $region54: #{senet_forward.1} parent=51 // pred_check_branch
        %1055 = sbr.rel (%p1053) target = $region56
      $region55: #{senet_forward.1} parent=51 // pred_region
        _
      $region56: #{senet_forward.1} parent=51 // pred_fallthru
        _
    $region52: #{senet_forward.1} parent=5 // pred_fallthru
      _
    %p1056 = scmp.le.s32.totalorder 2, %s14
    // Predicated region
    $region57: #{senet_forward.1} parent=5 // pred_check
      %p1057 = pneg %p1056
    $region58: #{senet_forward.1} parent=5 // pred_check_branch
      %1059 = sbr.rel (%p1057) target = $region60
    $region59: #{senet_forward.1} parent=5 // pred_region
      %s1060 = ssub.s32 %s14, 2
      // Predicated region
      $region61: #{senet_forward.1} parent=59 // pred_check
        %p1061 = pneg %p216
      $region62: #{senet_forward.1} parent=59 // pred_check_branch
        %1063 = sbr.rel (%p1061) target = $region64
      $region63: #{senet_forward.1} parent=59 // pred_region
        %p1064 = scmp.lt.s32.totalorder %s20, 1
        %s1065 = scalar_select %p1064, %s20, 1
        %s1066 = smul.addr %s1065, 3
        %s1067 = smul.addr %s1066, 8
        %s1068 = scalar_lea.vmem %s8, %s1067
      $region64: #{senet_forward.1} parent=59 // pred_fallthru
        _
    $region60: #{senet_forward.1} parent=5 // pred_fallthru
      _
  $region6: #{senet_forward.1} parent=0 // loop_footer
    %s18 = sadd.s32 1, %s14
  $region7: #{senet_forward.1} parent=0 // loop_footer_branch
    %13 = sbr.rel target = $region3
  $region8: #{senet_forward.1} parent=0 // loop_exit
    _

</llo_original>
